<compile_context>
chip_gen: v7x
topology: tpu7x:2x2x1
jax: 0.10.0
libtpu: 0.0.40
codegen_flags: <defaults>
</compile_context>

<pallas_src>
import jax
import jax.numpy as jnp
from jax.experimental import pallas as pl
from jax.experimental.pallas import tpu as pltpu

# --- synthetic config (stands in for cfg.*) ---------------------------------
T_DIM = 32   # cfg.TEXT.HIDDENSTATE / cfg.CAP.CONDITION_DIM
C_DIM = 16   # cfg.GAN.CONDITION_DIM
BATCH = 8


def ca_net_kernel(x_ref, w_mu_ref, w_lv_ref, b_ref, eps_ref, out_ref):
    # x_ref:    [bb, T_DIM]
    # w_mu_ref: [T_DIM, C_DIM]   (first half of Linear weight, transposed)
    # w_lv_ref: [T_DIM, C_DIM]   (second half of Linear weight, transposed)
    # b_ref:    [2, C_DIM]       (row 0 = mu bias, row 1 = logvar bias)
    # eps_ref:  [bb, C_DIM]
    # out_ref:  [3, bb, C_DIM]   (0 = c_code, 1 = mu, 2 = logvar)
    x = x_ref[...]

    # Two sub-size MXU pushes; both results are already lane-0 aligned, so no
    # XLU lane-shift is needed to separate mu from logvar.
    mu = jnp.dot(x, w_mu_ref[...], preferred_element_type=jnp.float32)
    lv = jnp.dot(x, w_lv_ref[...], preferred_element_type=jnp.float32)

    # bias + relu (relu commutes with the column split since it is elementwise)
    mu = jnp.maximum(mu + b_ref[0:1, :], 0.0)
    lv = jnp.maximum(lv + b_ref[1:2, :], 0.0)

    # reparametrize: c = eps * exp(0.5 * logvar) + mu
    std = jnp.exp(0.5 * lv)
    c = eps_ref[...] * std + mu

    # single output slab -> one writeback DMA
    out_ref[0, :, :] = c.astype(out_ref.dtype)
    out_ref[1, :, :] = mu.astype(out_ref.dtype)
    out_ref[2, :, :] = lv.astype(out_ref.dtype)


def ca_net_forward(text_embedding, w, b, eps):
    """text_embedding: [B, t_dim], w: [t_dim, 2*c_dim] (pre-transposed Linear
    weight), b: [2*c_dim], eps: [B, c_dim].  Returns (c_code, mu, logvar)."""
    B, t_dim = text_embedding.shape
    c_dim = eps.shape[1]
    assert w.shape == (t_dim, 2 * c_dim)

    # Host-side pre-split of weight / bias halves (free layout plumbing).
    w_mu = w[:, :c_dim]
    w_lv = w[:, c_dim:]
    b2 = b.reshape(2, c_dim)

    # Batch tiling: one block at toy sizes, 256-row tiles (parallel across
    # TensorCores on v7x) once B grows to real training sizes.
    block_b = 256 if (B % 256 == 0) else B
    grid = (B // block_b,)

    out_shape = jax.ShapeDtypeStruct((3, B, c_dim), jnp.float32)

    cost = pl.CostEstimate(
        flops=2 * B * t_dim * 2 * c_dim,
        transcendentals=B * c_dim,
        bytes_accessed=4 * (B * t_dim + t_dim * 2 * c_dim + 2 * c_dim
                            + B * c_dim + 3 * B * c_dim),
    )

    out = pl.pallas_call(
        ca_net_kernel,
        out_shape=out_shape,
        grid=grid,
        in_specs=[
            pl.BlockSpec((block_b, t_dim), lambda i: (i, 0)),   # x (tiled on B)
            pl.BlockSpec((t_dim, c_dim), lambda i: (0, 0)),     # W_mu (resident)
            pl.BlockSpec((t_dim, c_dim), lambda i: (0, 0)),     # W_lv (resident)
            pl.BlockSpec((2, c_dim), lambda i: (0, 0)),         # bias (resident)
            pl.BlockSpec((block_b, c_dim), lambda i: (i, 0)),   # eps (tiled on B)
        ],
        out_specs=pl.BlockSpec((3, block_b, c_dim), lambda i: (0, i, 0)),
        compiler_params=pltpu.CompilerParams(
            dimension_semantics=("parallel",)),
        cost_estimate=cost,
    )(text_embedding, w_mu, w_lv, b2, eps)

    return out[0], out[1], out[2]


def reference_forward(text_embedding, w, b, eps):
    h = jnp.maximum(text_embedding @ w + b, 0.0)
    mu = h[:, :C_DIM]
    logvar = h[:, C_DIM:]
    return eps * jnp.exp(0.5 * logvar) + mu, mu, logvar


if __name__ == "__main__":
    key = jax.random.PRNGKey(0)
    k_x, k_w, k_b, k_eps = jax.random.split(key, 4)

    # deterministic parameter init (PyTorch Linear-style uniform bound)
    bound = 1.0 / (T_DIM ** 0.5)
    w = jax.random.uniform(k_w, (T_DIM, 2 * C_DIM), jnp.float32, -bound, bound)
    b = jax.random.uniform(k_b, (2 * C_DIM,), jnp.float32, -bound, bound)

    text_embedding = jax.random.normal(k_x, (BATCH, T_DIM), jnp.float32)
    eps = jax.random.normal(k_eps, (BATCH, C_DIM), jnp.float32)

    c_code, mu, logvar = ca_net_forward(text_embedding, w, b, eps)
    jax.block_until_ready((c_code, mu, logvar))

    c_ref, mu_ref, lv_ref = reference_forward(text_embedding, w, b, eps)
    assert jnp.allclose(c_code, c_ref, atol=1e-5), "c_code mismatch"
    assert jnp.allclose(mu, mu_ref, atol=1e-5), "mu mismatch"
    assert jnp.allclose(logvar, lv_ref, atol=1e-5), "logvar mismatch"

    print("KERNEL_OK")
</pallas_src>

<mosaic_0001>
module attributes {stable_mosaic.version = 11 : i64} {
  func.func @ca_net_kernel(%arg0: i32, %arg1: memref<8x32xf32, #tpu.memory_space<vmem>>, %arg2: memref<32x16xf32, #tpu.memory_space<vmem>>, %arg3: memref<32x16xf32, #tpu.memory_space<vmem>>, %arg4: memref<2x16xf32, #tpu.memory_space<vmem>>, %arg5: memref<8x16xf32, #tpu.memory_space<vmem>>, %arg6: memref<3x8x16xf32, #tpu.memory_space<vmem>>) attributes {dimension_semantics = [#tpu.dimension_semantics<parallel>], iteration_bounds = array<i64: 1>, scalar_prefetch = 0 : i64, scratch_operands = 0 : i64, tpu.core_type = #tpu.core_type<tc>, window_params = [{transform_indices = @transform_0, window_bounds = array<i64: 8, 32>}, {pipeline_mode = #tpu.pipeline_mode<synchronous>, transform_indices = @transform_1, window_bounds = array<i64: 32, 16>}, {pipeline_mode = #tpu.pipeline_mode<synchronous>, transform_indices = @transform_2, window_bounds = array<i64: 32, 16>}, {pipeline_mode = #tpu.pipeline_mode<synchronous>, transform_indices = @transform_3, window_bounds = array<i64: 2, 16>}, {transform_indices = @transform_4, window_bounds = array<i64: 8, 16>}, {transform_indices = @transform_5, window_bounds = array<i64: 3, 8, 16>}]} {
    %c0 = arith.constant 0 : index
    %c0_0 = arith.constant 0 : index
    %0 = vector.load %arg1[%c0, %c0_0] : memref<8x32xf32, #tpu.memory_space<vmem>>, vector<8x32xf32>
    %c0_1 = arith.constant 0 : index
    %c0_2 = arith.constant 0 : index
    %1 = vector.load %arg2[%c0_1, %c0_2] : memref<32x16xf32, #tpu.memory_space<vmem>>, vector<32x16xf32>
    %cst = arith.constant dense<0.000000e+00> : vector<8x16xf32>
    %2 = tpu.matmul %0, %1, %cst {dimension_numbers = #tpu.dot_dimension_numbers<[1], [0], [0], [1], [0, 0, 1, 1], [], []>} : vector<8x32xf32>, vector<32x16xf32>, vector<8x16xf32> -> vector<8x16xf32>
    %c0_3 = arith.constant 0 : index
    %c0_4 = arith.constant 0 : index
    %3 = vector.load %arg3[%c0_3, %c0_4] : memref<32x16xf32, #tpu.memory_space<vmem>>, vector<32x16xf32>
    %cst_5 = arith.constant dense<0.000000e+00> : vector<8x16xf32>
    %4 = tpu.matmul %0, %3, %cst_5 {dimension_numbers = #tpu.dot_dimension_numbers<[1], [0], [0], [1], [0, 0, 1, 1], [], []>} : vector<8x32xf32>, vector<32x16xf32>, vector<8x16xf32> -> vector<8x16xf32>
    %c0_6 = arith.constant 0 : index
    %c0_7 = arith.constant 0 : index
    %5 = vector.load %arg4[%c0_6, %c0_7] : memref<2x16xf32, #tpu.memory_space<vmem>>, vector<1x16xf32>
    %6 = vector.broadcast %5 : vector<1x16xf32> to vector<8x16xf32>
    %7 = arith.addf %2, %6 : vector<8x16xf32>
    %cst_8 = arith.constant 0.000000e+00 : f32
    %8 = vector.broadcast %cst_8 : f32 to vector<8x16xf32>
    %9 = arith.maximumf %7, %8 : vector<8x16xf32>
    %c1 = arith.constant 1 : index
    %c0_9 = arith.constant 0 : index
    %10 = vector.load %arg4[%c1, %c0_9] : memref<2x16xf32, #tpu.memory_space<vmem>>, vector<1x16xf32>
    %11 = vector.broadcast %10 : vector<1x16xf32> to vector<8x16xf32>
    %12 = arith.addf %4, %11 : vector<8x16xf32>
    %cst_10 = arith.constant 0.000000e+00 : f32
    %13 = vector.broadcast %cst_10 : f32 to vector<8x16xf32>
    %14 = arith.maximumf %12, %13 : vector<8x16xf32>
    %cst_11 = arith.constant 5.000000e-01 : f32
    %15 = vector.broadcast %cst_11 : f32 to vector<8x16xf32>
    %16 = arith.mulf %15, %14 : vector<8x16xf32>
    %17 = math.exp %16 : vector<8x16xf32>
    %c0_12 = arith.constant 0 : index
    %c0_13 = arith.constant 0 : index
    %18 = vector.load %arg5[%c0_12, %c0_13] : memref<8x16xf32, #tpu.memory_space<vmem>>, vector<8x16xf32>
    %19 = arith.mulf %18, %17 : vector<8x16xf32>
    %20 = arith.addf %19, %9 : vector<8x16xf32>
    %c0_14 = arith.constant 0 : index
    %c0_15 = arith.constant 0 : index
    %c0_16 = arith.constant 0 : index
    %21 = vector.load %arg6[%c0_14, %c0_15, %c0_16] : memref<3x8x16xf32, #tpu.memory_space<vmem>>, vector<1x8x16xf32>
    %22 = vector.shape_cast %21 : vector<1x8x16xf32> to vector<8x16xf32>
    %23 = vector.shape_cast %20 : vector<8x16xf32> to vector<1x8x16xf32>
    tpu.vector_store %arg6[%c0_14, %c0_15, %c0_16], %23 {strides = array<i32>} : memref<3x8x16xf32, #tpu.memory_space<vmem>>, vector<1x8x16xf32>,
    %c1_17 = arith.constant 1 : index
    %c0_18 = arith.constant 0 : index
    %c0_19 = arith.constant 0 : index
    %24 = vector.load %arg6[%c1_17, %c0_18, %c0_19] : memref<3x8x16xf32, #tpu.memory_space<vmem>>, vector<1x8x16xf32>
    %25 = vector.shape_cast %24 : vector<1x8x16xf32> to vector<8x16xf32>
    %26 = vector.shape_cast %9 : vector<8x16xf32> to vector<1x8x16xf32>
    tpu.vector_store %arg6[%c1_17, %c0_18, %c0_19], %26 {strides = array<i32>} : memref<3x8x16xf32, #tpu.memory_space<vmem>>, vector<1x8x16xf32>,
    %c2 = arith.constant 2 : index
    %c0_20 = arith.constant 0 : index
    %c0_21 = arith.constant 0 : index
    %27 = vector.load %arg6[%c2, %c0_20, %c0_21] : memref<3x8x16xf32, #tpu.memory_space<vmem>>, vector<1x8x16xf32>
    %28 = vector.shape_cast %27 : vector<1x8x16xf32> to vector<8x16xf32>
    %29 = vector.shape_cast %14 : vector<8x16xf32> to vector<1x8x16xf32>
    tpu.vector_store %arg6[%c2, %c0_20, %c0_21], %29 {strides = array<i32>} : memref<3x8x16xf32, #tpu.memory_space<vmem>>, vector<1x8x16xf32>,
    return
  }
  func.func @transform_0(%arg0: i32) -> (i32, i32) {
    %c0_i32 = arith.constant 0 : i32
    %c0_i32_0 = arith.constant 0 : i32
    return %arg0, %c0_i32 : i32, i32
  }
  func.func @transform_1(%arg0: i32) -> (i32, i32) {
    %c0_i32 = arith.constant 0 : i32
    %c0_i32_0 = arith.constant 0 : i32
    %c0_i32_1 = arith.constant 0 : i32
    return %c0_i32, %c0_i32_0 : i32, i32
  }
  func.func @transform_2(%arg0: i32) -> (i32, i32) {
    %c0_i32 = arith.constant 0 : i32
    %c0_i32_0 = arith.constant 0 : i32
    %c0_i32_1 = arith.constant 0 : i32
    return %c0_i32, %c0_i32_0 : i32, i32
  }
  func.func @transform_3(%arg0: i32) -> (i32, i32) {
    %c0_i32 = arith.constant 0 : i32
    %c0_i32_0 = arith.constant 0 : i32
    %c0_i32_1 = arith.constant 0 : i32
    return %c0_i32, %c0_i32_0 : i32, i32
  }
  func.func @transform_4(%arg0: i32) -> (i32, i32) {
    %c0_i32 = arith.constant 0 : i32
    %c0_i32_0 = arith.constant 0 : i32
    return %arg0, %c0_i32 : i32, i32
  }
  func.func @transform_5(%arg0: i32) -> (i32, i32, i32) {
    %c0_i32 = arith.constant 0 : i32
    %c0_i32_0 = arith.constant 0 : i32
    %c0_i32_1 = arith.constant 0 : i32
    return %c0_i32, %arg0, %c0_i32_0 : i32, i32, i32
  }
}

</mosaic_0001>

<llo_original>
// kernel: tpu_custom_call.1
$region0: #{tpu_custom_call.1}
  #allocation0 [shape = 'u32[]', space=smem, size = 0x4, offset = 0x4, fixed_abs, tag = 'smem constant byte address 0x4 - core index']
  #allocation1 [shape = 'u32[144,128]{1,0:T(1,128)}', space=vmem, size = 0x12000, scoped, tag = 'internal scratch']
  %s0 = inlined_call_operand.vmem [shape: f32[8,32], index: 0, kind: input, shape index: {}]
  %s1 = inlined_call_operand.vmem [shape: f32[32,16], index: 1, kind: input, shape index: {}]
  %s2 = inlined_call_operand.vmem [shape: f32[32,16], index: 2, kind: input, shape index: {}]
  %s3 = inlined_call_operand.vmem [shape: f32[2,16], index: 3, kind: input, shape index: {}]
  %s4 = inlined_call_operand.vmem [shape: f32[8,16], index: 4, kind: input, shape index: {}]
  %s5 = inlined_call_operand.hbm [shape: f32[3,8,16], index: 5, kind: output, shape index: {}]
  %s6 = sld [smem:[#allocation0]]
  $region30: #{tpu_custom_call.1} parent=0
    _
  %s8 = ssub.s32 1, %s6
  %s9 = scalar_select 0, %s8, %s6
  $region1: #{tpu_custom_call.1} parent=0
    #allocation2 [shape = 'u8[12288]{0}', space=vmem, size = 0x3000, scoped, tag = 'output window, operand 0, single buffered']
    #allocation3 [shape = 's32[1]{0}', space=sflag, size = 0x4, scoped, tag = 'scoped memory for tpu_custom_call.1']
    %10 = vsyncpa [#allocation3], 0
    // Predicated region
    $region2: #{tpu_custom_call.1} parent=1 // pred_check
      _
    $region3: #{tpu_custom_call.1} parent=1 // pred_check_branch
      %12 = sbr.rel (0) target = $region5
    $region4: #{tpu_custom_call.1} parent=1 // pred_region
      _
    $region5: #{tpu_custom_call.1} parent=1 // pred_fallthru
      _
    // Predicated region
    $region6: #{tpu_custom_call.1} parent=1 // pred_check
      _
    $region7: #{tpu_custom_call.1} parent=1 // pred_check_branch
      %14 = sbr.rel (0) target = $region9
    $region8: #{tpu_custom_call.1} parent=1 // pred_region
      _
    $region9: #{tpu_custom_call.1} parent=1 // pred_fallthru
      _
    // Predicated region
    $region10: #{tpu_custom_call.1} parent=1 // pred_check
      _
    $region11: #{tpu_custom_call.1} parent=1 // pred_check_branch
      %16 = sbr.rel (0) target = $region13
    $region12: #{tpu_custom_call.1} parent=1 // pred_region
      _
    $region13: #{tpu_custom_call.1} parent=1 // pred_fallthru
      _
    // Predicated region
    $region14: #{tpu_custom_call.1} parent=1 // pred_check
      _
    $region15: #{tpu_custom_call.1} parent=1 // pred_check_branch
      %18 = sbr.rel (0) target = $region17
    $region16: #{tpu_custom_call.1} parent=1 // pred_region
      _
    $region17: #{tpu_custom_call.1} parent=1 // pred_fallthru
      _
    // Predicated region
    $region18: #{tpu_custom_call.1} parent=1 // pred_check
      _
    $region19: #{tpu_custom_call.1} parent=1 // pred_check_branch
      %20 = sbr.rel (0) target = $region21
    $region20: #{tpu_custom_call.1} parent=1 // pred_region
      _
    $region21: #{tpu_custom_call.1} parent=1 // pred_fallthru
      _
    %v21 = vld [vmem:[%s0] sm:$0xff]
    %v22 = vld [vmem:[%s1] sm:$0xff]
    %v23 = vld [vmem:[%s1 + $0x8] sm:$0xff]
    %v24 = vld [vmem:[%s1 + $0x10] sm:$0xff]
    %v25 = vld [vmem:[%s1 + $0x18] sm:$0xff]
    %v26 = vld [vmem:[%s2] sm:$0xff]
    %v27 = vld [vmem:[%s2 + $0x8] sm:$0xff]
    %v28 = vld [vmem:[%s2 + $0x10] sm:$0xff]
    %v29 = vld [vmem:[%s2 + $0x18] sm:$0xff]
    %v30 = vld [vmem:[%s3] sm:$0x1]
    %v31 = vlaneseq
    %v32 = vshrl.u32 %v31, 7
    %v33 = vsub.s32 0, %v32
    %v34 = vrot.slane %v30, %v33
    %vm35 = vcmask 261120
    %v37 = vsel %vm35, %v21, 0
    %39 = vmatprep.subr.mxu0 0.0
    %40 = vmatpush1.msra.mxu0 %v22
    %41 = vmatprep.subr.mxu0 0.0
    %42 = vmatpush1.msra.mxu0 %v23
    %43 = vmatprep.subr.mxu0 0.0
    %44 = vmatpush1.msra.mxu0 %v24
    %45 = vmatprep.subr.mxu0 0.0
    %46 = vmatpush1.msra.mxu0 %v25
    %47 = vmatprep.subr.mxu0 0.0
    %48 = vmatpush1.msra.mxu0 0.0
    %49 = vmatprep.subr.mxu0 0.0
    %50 = vmatpush1.msra.mxu0 0.0
    %51 = vmatprep.subr.mxu0 0.0
    %52 = vmatpush1.msra.mxu0 0.0
    %53 = vmatprep.subr.mxu0 0.0
    %54 = vmatpush1.msra.mxu0 0.0
    %55 = vmatprep.subr.mxu0 0.0
    %56 = vmatpush1.msra.mxu0 0.0
    %57 = vmatprep.subr.mxu0 0.0
    %58 = vmatpush1.msra.mxu0 0.0
    %59 = vmatprep.subr.mxu0 0.0
    %60 = vmatpush1.msra.mxu0 0.0
    %61 = vmatprep.subr.mxu0 0.0
    %62 = vmatpush1.msra.mxu0 0.0
    %63 = vmatprep.subr.mxu0 0.0
    %64 = vmatpush1.msra.mxu0 0.0
    %65 = vmatprep.subr.mxu0 0.0
    %66 = vmatpush1.msra.mxu0 0.0
    %67 = vmatprep.subr.mxu0 0.0
    %68 = vmatpush1.msra.mxu0 0.0
    %69 = vmatprep.subr.mxu0 0.0
    %70 = vmatpush1.msra.mxu0 0.0
    %71 = vmatprep.subr.mxu0 0.0
    %72 = vmatpush1.msra.mxu0 0.0
    %73 = vmatprep.subr.mxu0 0.0
    %74 = vmatpush1.msra.mxu0 0.0
    %75 = vmatprep.subr.mxu0 0.0
    %76 = vmatpush1.msra.mxu0 0.0
    %77 = vmatprep.subr.mxu0 0.0
    %78 = vmatpush1.msra.mxu0 0.0
    %79 = vmatprep.subr.mxu0 0.0
    %80 = vmatpush1.msra.mxu0 0.0
    %81 = vmatprep.subr.mxu0 0.0
    %82 = vmatpush1.msra.mxu0 0.0
    %83 = vmatprep.subr.mxu0 0.0
    %84 = vmatpush1.msra.mxu0 0.0
    %85 = vmatprep.subr.mxu0 0.0
    %86 = vmatpush1.msra.mxu0 0.0
    %87 = vmatprep.subr.mxu0 0.0
    %88 = vmatpush1.msra.mxu0 0.0
    %89 = vmatprep.subr.mxu0 0.0
    %90 = vmatpush1.msra.mxu0 0.0
    %91 = vmatprep.subr.mxu0 0.0
    %92 = vmatpush1.msra.mxu0 0.0
    %93 = vmatprep.subr.mxu0 0.0
    %94 = vmatpush1.msra.mxu0 0.0
    %95 = vmatprep.subr.mxu0 0.0
    %96 = vmatpush1.msra.mxu0 0.0
    %97 = vmatprep.subr.mxu0 0.0
    %98 = vmatpush1.msra.mxu0 0.0
    %99 = vmatprep.subr.mxu0 0.0
    %100 = vmatpush1.msra.mxu0 0.0
    %101 = vmatprep.subr.mxu0 0.0
    %102 = vmatpush1.msra.mxu0 0.0
    %103 = vmatprep.mubr.f32.mxu0 0.0
    %104 = vmatmul.mubr.f32.gmra.mrb[0].mxu0 %v37
    %v105 = vpop.f32.mrb[0].mxu0
    %v106 = vadd.f32 %v34, %v105
    %v107 = vpop.f32.mrb[0].mxu0
    %108 = vdwg.mxu0
    %v109 = vmax.f32 %v106, 0.0
    %v110 = vld [vmem:[%s3 + $0x1] sm:$0x1]
    %v111 = vlaneseq
    %v112 = vshrl.u32 %v111, 7
    %v113 = vsub.s32 0, %v112
    %v114 = vrot.slane %v110, %v113
    %115 = vmatprep.subr.mxu0 0.0
    %116 = vmatpush1.msra.mxu0 %v26
    %117 = vmatprep.subr.mxu0 0.0
    %118 = vmatpush1.msra.mxu0 %v27
    %119 = vmatprep.subr.mxu0 0.0
    %120 = vmatpush1.msra.mxu0 %v28
    %121 = vmatprep.subr.mxu0 0.0
    %122 = vmatpush1.msra.mxu0 %v29
    %123 = vmatprep.subr.mxu0 0.0
    %124 = vmatpush1.msra.mxu0 0.0
    %125 = vmatprep.subr.mxu0 0.0
    %126 = vmatpush1.msra.mxu0 0.0
    %127 = vmatprep.subr.mxu0 0.0
    %128 = vmatpush1.msra.mxu0 0.0
    %129 = vmatprep.subr.mxu0 0.0
    %130 = vmatpush1.msra.mxu0 0.0
    %131 = vmatprep.subr.mxu0 0.0
    %132 = vmatpush1.msra.mxu0 0.0
    %133 = vmatprep.subr.mxu0 0.0
    %134 = vmatpush1.msra.mxu0 0.0
    %135 = vmatprep.subr.mxu0 0.0
    %136 = vmatpush1.msra.mxu0 0.0
    %137 = vmatprep.subr.mxu0 0.0
    %138 = vmatpush1.msra.mxu0 0.0
    %139 = vmatprep.subr.mxu0 0.0
    %140 = vmatpush1.msra.mxu0 0.0
    %141 = vmatprep.subr.mxu0 0.0
    %142 = vmatpush1.msra.mxu0 0.0
    %143 = vmatprep.subr.mxu0 0.0
    %144 = vmatpush1.msra.mxu0 0.0
    %145 = vmatprep.subr.mxu0 0.0
    %146 = vmatpush1.msra.mxu0 0.0
    %147 = vmatprep.subr.mxu0 0.0
    %148 = vmatpush1.msra.mxu0 0.0
    %149 = vmatprep.subr.mxu0 0.0
    %150 = vmatpush1.msra.mxu0 0.0
    %151 = vmatprep.subr.mxu0 0.0
    %152 = vmatpush1.msra.mxu0 0.0
    %153 = vmatprep.subr.mxu0 0.0
    %154 = vmatpush1.msra.mxu0 0.0
    %155 = vmatprep.subr.mxu0 0.0
    %156 = vmatpush1.msra.mxu0 0.0
    %157 = vmatprep.subr.mxu0 0.0
    %158 = vmatpush1.msra.mxu0 0.0
    %159 = vmatprep.subr.mxu0 0.0
    %160 = vmatpush1.msra.mxu0 0.0
    %161 = vmatprep.subr.mxu0 0.0
    %162 = vmatpush1.msra.mxu0 0.0
    %163 = vmatprep.subr.mxu0 0.0
    %164 = vmatpush1.msra.mxu0 0.0
    %165 = vmatprep.subr.mxu0 0.0
    %166 = vmatpush1.msra.mxu0 0.0
    %167 = vmatprep.subr.mxu0 0.0
    %168 = vmatpush1.msra.mxu0 0.0
    %169 = vmatprep.subr.mxu0 0.0
    %170 = vmatpush1.msra.mxu0 0.0
    %171 = vmatprep.subr.mxu0 0.0
    %172 = vmatpush1.msra.mxu0 0.0
    %173 = vmatprep.subr.mxu0 0.0
    %174 = vmatpush1.msra.mxu0 0.0
    %175 = vmatprep.subr.mxu0 0.0
    %176 = vmatpush1.msra.mxu0 0.0
    %177 = vmatprep.subr.mxu0 0.0
    %178 = vmatpush1.msra.mxu0 0.0
    %179 = vmatprep.mubr.f32.mxu0 0.0
    %180 = vmatmul.mubr.f32.gmra.mrb[0].mxu0 %v37
    %v181 = vpop.f32.mrb[0].mxu0
    %v182 = vadd.f32 %v114, %v181
    %v183 = vpop.f32.mrb[0].mxu0
    %184 = vdwg.mxu0
    %v185 = vmax.f32 %v182, 0.0
    %v186 = vmul.f32 %v185, 0.5
    %v187 = vmul.f32 %v186, 1.442695
    %v188 = vpow.pop %v187
    %v189 = vld [vmem:[%s4] sm:$0xff]
    %v190 = vmul.f32 %v189, %v188
    %v191 = vadd.f32 %v190, %v109
    %vm192 = vcmask 130048
    %193 = vst.msk [vmem:[#allocation2] sm:$0xff] %vm192, %v191
    %s194 = scalar_lea.vmem [#allocation2], 8
    %195 = vst.msk [vmem:[%s194] sm:$0xff] %vm192, %v109
    %s196 = scalar_lea.vmem [#allocation2], 16
    %197 = vst.msk [vmem:[%s196] sm:$0xff] %vm192, %v185
    // Predicated region
    $region22: #{tpu_custom_call.1} parent=1 // pred_check
      _
    $region23: #{tpu_custom_call.1} parent=1 // pred_check_branch
      %199 = sbr.rel (0) target = $region25
    $region24: #{tpu_custom_call.1} parent=1 // pred_region
      %s201 = ssub.s32 384, 384
      %202 = vsyncadd [#allocation3], %s201
      %s203 = sshll.u32 [#allocation2], 4
      %s204 = int_to_ptr.vmem [resolvable:$true] %s203
      %209 = dma.vmem_to_hbm [thread:$0]  %s204, 384, %s5, [#allocation3], 128, 128, 8
    $region25: #{tpu_custom_call.1} parent=1 // pred_fallthru
      _
    // Predicated region
    $region26: #{tpu_custom_call.1} parent=1 // pred_check
      _
    $region27: #{tpu_custom_call.1} parent=1 // pred_check_branch
      %211 = sbr.rel (0) target = $region29
    $region28: #{tpu_custom_call.1} parent=1 // pred_region
      %212 = dma.done [#allocation3], 384
    $region29: #{tpu_custom_call.1} parent=1 // pred_fallthru
      _
    %213 = vsyncpa [#allocation3], 1

</llo_original>
